<compile_context>
chip_gen: v7x
topology: tpu7x:2x2x1
jax: 0.10.0
libtpu: 0.0.40
codegen_flags: <defaults>
</compile_context>

<pallas_src>
import functools

import jax
import jax.numpy as jnp
from jax.experimental import pallas as pl
from jax.experimental.pallas import tpu as pltpu


def _round_up(x, m):
    return ((x + m - 1) // m) * m


def _cdiv(a, b):
    return -(-a // b)


def _hash32(x):
    """lowbias32 finalizer: uint32 -> uint32, pure VPU int ops."""
    x = x ^ (x >> jnp.uint32(16))
    x = x * jnp.uint32(0x7FEB352D)
    x = x ^ (x >> jnp.uint32(15))
    x = x * jnp.uint32(0x846CA68B)
    x = x ^ (x >> jnp.uint32(16))
    return x


def _msd_kernel(seed_ref, x_ref, w_ref, b_ref, o_ref, *,
                num_samples, thr_byte, scale):
    """Multi-sample dropout + linear classifier (mean over samples).

    seed_ref : SMEM (1,)        int32 -- scalar-prefetched PRNG seed
    x_ref    : VMEM (TB, H)     x.dtype  -- activation tile
    w_ref    : VMEM (H, Cpad)   weight dtype -- classifier weight (resident)
    b_ref    : VMEM (1, Cpad)   float32  -- classifier bias (resident)
    o_ref    : VMEM (TB, Cpad)  float32  -- averaged logits tile
    """
    tb, h = x_ref.shape

    # ---- dropout keep-counts (no x needed yet; keeps live temps small) ----
    # Per-element counter in uint32; tile/seed offsets folded into ONE scalar.
    seed_u = seed_ref[0].astype(jnp.uint32)
    off = (seed_u * jnp.uint32(0x9E3779B9)
           + jnp.uint32(pl.program_id(0)).astype(jnp.uint32)
           * jnp.uint32((tb * h) & 0xFFFFFFFF)
           + jnp.uint32(0x7F4A7C15))

    row = jax.lax.broadcasted_iota(jnp.int32, (tb, h), 0).astype(jnp.uint32)
    col = jax.lax.broadcasted_iota(jnp.int32, (tb, h), 1).astype(jnp.uint32)
    base = row * jnp.uint32(h) + col + off

    thr = jnp.uint32(thr_byte)
    counts = jnp.zeros((tb, h), jnp.float32)
    n_words = (num_samples + 3) // 4          # one hash word -> 4 Bernoulli bytes
    for w in range(n_words):
        if n_words > 1:
            bits = _hash32(base + jnp.uint32((w * 0x85EBCA6B + 1) & 0xFFFFFFFF))
        else:
            bits = _hash32(base)
        for b in range(min(4, num_samples - 4 * w)):
            if b == 0:
                byte = bits & jnp.uint32(0xFF)
            elif b == 3:
                byte = bits >> jnp.uint32(24)
            else:
                byte = (bits >> jnp.uint32(8 * b)) & jnp.uint32(0xFF)
            counts = counts + (byte >= thr).astype(jnp.float32)

    # ---- single fused classifier matmul -----------------------------------
    x = x_ref[...]
    xd = x * counts.astype(x.dtype)           # counts <= S, exact in bf16/f32
    acc = jnp.dot(xd, w_ref[...], preferred_element_type=jnp.float32)
    o_ref[...] = acc * jnp.float32(scale) + b_ref[...]


def multi_sample_dropout(x, weight, bias, seed, *, max_dropout_rate, num_samples,
                         tile_rows=512):
    """x: (B, H); weight: (H, C) (transpose of torch's (out,in)); bias: (C,)."""
    B, H = x.shape
    H2, C = weight.shape
    assert H == H2

    p = float(max_dropout_rate)
    keep = 1.0 - p
    inv_keep = 1.0 / keep if keep > 0.0 else 0.0
    scale = inv_keep / float(num_samples)

    # Keep prob = P(byte >= thr) = 1 - p, quantized to 1/256.
    # TODO(synk): rate granularity is 1/256; exact rates need 32-bit compares.
    thr_byte = min(int(round(p * 256.0)), 256)

    # Lane-dense output: pad class dim to a multiple of 128 (and no further).
    C_pad = _round_up(max(C, 1), 128)

    # Batch tiling: TB multiple of 8, <= tile_rows; ensure >=2 tiles for
    # megacore (v7x) whenever the batch allows it.  No batch padding of x.
    TB = min(int(tile_rows), _round_up(B, 8))
    if B > 8 and _cdiv(B, TB) < 2:
        TB = _round_up(_cdiv(B, 2), 8)
    n_tiles = _cdiv(B, TB)

    wp = jnp.zeros((H, C_pad), weight.dtype).at[:, :C].set(weight)
    bp = jnp.zeros((1, C_pad), jnp.float32).at[0, :C].set(bias.astype(jnp.float32))

    seed_arr = jnp.asarray([seed], dtype=jnp.int32)

    kernel = functools.partial(
        _msd_kernel, num_samples=int(num_samples), thr_byte=thr_byte, scale=scale)

    # VMEM budget: double-buffered x + output tiles, resident W/bias, plus
    # hash/count temporaries.  Keep under the v7x 64 MiB physical ceiling.
    xb = jnp.dtype(x.dtype).itemsize
    wb = jnp.dtype(weight.dtype).itemsize
    vmem_need = (2 * TB * H * xb + H * C_pad * wb + C_pad * 4
                 + 2 * TB * C_pad * 4 + 3 * TB * H * 4 + (2 << 20))
    vmem_limit = int(min(max(vmem_need, 32 << 20), 60 << 20))

    out = pl.pallas_call(
        kernel,
        out_shape=jax.ShapeDtypeStruct((B, C_pad), jnp.float32),
        grid_spec=pltpu.PrefetchScalarGridSpec(
            num_scalar_prefetch=1,
            grid=(n_tiles,),
            in_specs=[
                pl.BlockSpec((TB, H), lambda i, seed: (i, 0)),      # x tile
                pl.BlockSpec((H, C_pad), lambda i, seed: (0, 0)),   # W (resident)
                pl.BlockSpec((1, C_pad), lambda i, seed: (0, 0)),   # b (resident)
            ],
            out_specs=pl.BlockSpec((TB, C_pad), lambda i, seed: (i, 0)),
        ),
        compiler_params=pltpu.CompilerParams(
            dimension_semantics=("parallel",),
            vmem_limit_bytes=vmem_limit),
    )(seed_arr, x, wp, bp)

    return out[:, :C]


if __name__ == "__main__":
    # Small shapes consistent with the module: classifier = nn.Linear(hidden, classes)
    B, H, C = 8, 32, 4
    MAX_DROPOUT_RATE = 0.5
    NUM_SAMPLES = 4

    key = jax.random.PRNGKey(0)
    kx, kw, kb = jax.random.split(key, 3)

    x = jax.random.normal(kx, (B, H), dtype=jnp.float32)

    # Deterministic nn.Linear-style init: U(-1/sqrt(H), 1/sqrt(H))
    bound = 1.0 / (H ** 0.5)
    weight = jax.random.uniform(kw, (H, C), minval=-bound, maxval=bound,
                                dtype=jnp.float32)
    bias = jax.random.uniform(kb, (C,), minval=-bound, maxval=bound,
                              dtype=jnp.float32)

    # Train-mode dropout run.
    out = multi_sample_dropout(
        x, weight, bias, seed=1234,
        max_dropout_rate=MAX_DROPOUT_RATE, num_samples=NUM_SAMPLES)
    jax.block_until_ready(out)
    assert out.shape == (B, C) and out.dtype == jnp.float32
    assert bool(jnp.all(jnp.isfinite(out)))

    # Sanity: p = 0 must equal the plain classifier (mean of S identical terms).
    out_p0 = multi_sample_dropout(
        x, weight, bias, seed=1234,
        max_dropout_rate=0.0, num_samples=NUM_SAMPLES)
    ref_p0 = x @ weight + bias
    assert bool(jnp.allclose(out_p0, ref_p0, atol=1e-4, rtol=1e-4))

    # Sanity: p = 1 zeroes every activation -> bias-only output (exact).
    out_p1 = multi_sample_dropout(
        x, weight, bias, seed=7,
        max_dropout_rate=1.0, num_samples=NUM_SAMPLES)
    ref_p1 = jnp.broadcast_to(bias[None, :], (B, C))
    assert bool(jnp.allclose(out_p1, ref_p1, atol=1e-6, rtol=1e-6))

    print("KERNEL_OK")
</pallas_src>

<mosaic_0001>
module attributes {stable_mosaic.version = 11 : i64} {
  func.func @_msd_kernel(%arg0: i32, %arg1: memref<1xi32, #tpu.memory_space<smem>>, %arg2: memref<8x32xf32, #tpu.memory_space<vmem>>, %arg3: memref<32x128xf32, #tpu.memory_space<vmem>>, %arg4: memref<1x128xf32, #tpu.memory_space<vmem>>, %arg5: memref<8x128xf32, #tpu.memory_space<vmem>>) attributes {dimension_semantics = [#tpu.dimension_semantics<parallel>], iteration_bounds = array<i64: 1>, scalar_prefetch = 1 : i64, scratch_operands = 0 : i64, tpu.core_type = #tpu.core_type<tc>, window_params = [{transform_indices = @transform_0, window_bounds = array<i64: 8, 32>}, {pipeline_mode = #tpu.pipeline_mode<synchronous>, transform_indices = @transform_1, window_bounds = array<i64: 32, 128>}, {pipeline_mode = #tpu.pipeline_mode<synchronous>, transform_indices = @transform_2, window_bounds = array<i64: 1, 128>}, {transform_indices = @transform_3, window_bounds = array<i64: 8, 128>}]} {
    %c0 = arith.constant 0 : index
    %0 = memref.load %arg1[%c0] : memref<1xi32, #tpu.memory_space<smem>>
    %c-1640531527_i32 = arith.constant -1640531527 : i32
    %1 = arith.muli %0, %c-1640531527_i32 : i32
    %c256_i32 = arith.constant 256 : i32
    %2 = arith.muli %arg0, %c256_i32 : i32
    %3 = arith.addi %1, %2 : i32
    %c2135587861_i32 = arith.constant 2135587861 : i32
    %4 = arith.addi %3, %c2135587861_i32 : i32
    %5 = tpu.iota {dimensions = array<i32: 0>} : vector<8x32xi32>
    %6 = tpu.iota {dimensions = array<i32: 1>} : vector<8x32xi32>
    %c32_i32 = arith.constant 32 : i32
    %7 = vector.broadcast %c32_i32 : i32 to vector<8x32xi32>
    %8 = arith.muli %5, %7 : vector<8x32xi32>
    %9 = arith.addi %8, %6 : vector<8x32xi32>
    %10 = vector.broadcast %4 : i32 to vector<8x32xi32>
    %11 = arith.addi %9, %10 : vector<8x32xi32>
    %cst = arith.constant 0.000000e+00 : f32
    %12 = vector.broadcast %cst : f32 to vector<8x32xf32>
    %c16_i32 = arith.constant 16 : i32
    %13 = vector.broadcast %c16_i32 : i32 to vector<8x32xi32>
    %14 = arith.shrui %11, %13 : vector<8x32xi32>
    %15 = arith.xori %11, %14 : vector<8x32xi32>
    %c2146121005_i32 = arith.constant 2146121005 : i32
    %16 = vector.broadcast %c2146121005_i32 : i32 to vector<8x32xi32>
    %17 = arith.muli %15, %16 : vector<8x32xi32>
    %c15_i32 = arith.constant 15 : i32
    %18 = vector.broadcast %c15_i32 : i32 to vector<8x32xi32>
    %19 = arith.shrui %17, %18 : vector<8x32xi32>
    %20 = arith.xori %17, %19 : vector<8x32xi32>
    %c-2073254261_i32 = arith.constant -2073254261 : i32
    %21 = vector.broadcast %c-2073254261_i32 : i32 to vector<8x32xi32>
    %22 = arith.muli %20, %21 : vector<8x32xi32>
    %c16_i32_0 = arith.constant 16 : i32
    %23 = vector.broadcast %c16_i32_0 : i32 to vector<8x32xi32>
    %24 = arith.shrui %22, %23 : vector<8x32xi32>
    %25 = arith.xori %22, %24 : vector<8x32xi32>
    %c255_i32 = arith.constant 255 : i32
    %26 = vector.broadcast %c255_i32 : i32 to vector<8x32xi32>
    %27 = arith.andi %25, %26 : vector<8x32xi32>
    %c128_i32 = arith.constant 128 : i32
    %28 = vector.broadcast %c128_i32 : i32 to vector<8x32xi32>
    %29 = arith.cmpi uge, %27, %28 : vector<8x32xi32>
    %30 = arith.extui %29 : vector<8x32xi1> to vector<8x32xi32>
    %31 = arith.sitofp %30 : vector<8x32xi32> to vector<8x32xf32>
    %32 = arith.addf %12, %31 : vector<8x32xf32>
    %c8_i32 = arith.constant 8 : i32
    %33 = vector.broadcast %c8_i32 : i32 to vector<8x32xi32>
    %34 = arith.shrui %25, %33 : vector<8x32xi32>
    %c255_i32_1 = arith.constant 255 : i32
    %35 = vector.broadcast %c255_i32_1 : i32 to vector<8x32xi32>
    %36 = arith.andi %34, %35 : vector<8x32xi32>
    %c128_i32_2 = arith.constant 128 : i32
    %37 = vector.broadcast %c128_i32_2 : i32 to vector<8x32xi32>
    %38 = arith.cmpi uge, %36, %37 : vector<8x32xi32>
    %39 = arith.extui %38 : vector<8x32xi1> to vector<8x32xi32>
    %40 = arith.sitofp %39 : vector<8x32xi32> to vector<8x32xf32>
    %41 = arith.addf %32, %40 : vector<8x32xf32>
    %c16_i32_3 = arith.constant 16 : i32
    %42 = vector.broadcast %c16_i32_3 : i32 to vector<8x32xi32>
    %43 = arith.shrui %25, %42 : vector<8x32xi32>
    %c255_i32_4 = arith.constant 255 : i32
    %44 = vector.broadcast %c255_i32_4 : i32 to vector<8x32xi32>
    %45 = arith.andi %43, %44 : vector<8x32xi32>
    %c128_i32_5 = arith.constant 128 : i32
    %46 = vector.broadcast %c128_i32_5 : i32 to vector<8x32xi32>
    %47 = arith.cmpi uge, %45, %46 : vector<8x32xi32>
    %48 = arith.extui %47 : vector<8x32xi1> to vector<8x32xi32>
    %49 = arith.sitofp %48 : vector<8x32xi32> to vector<8x32xf32>
    %50 = arith.addf %41, %49 : vector<8x32xf32>
    %c24_i32 = arith.constant 24 : i32
    %51 = vector.broadcast %c24_i32 : i32 to vector<8x32xi32>
    %52 = arith.shrui %25, %51 : vector<8x32xi32>
    %c128_i32_6 = arith.constant 128 : i32
    %53 = vector.broadcast %c128_i32_6 : i32 to vector<8x32xi32>
    %54 = arith.cmpi uge, %52, %53 : vector<8x32xi32>
    %55 = arith.extui %54 : vector<8x32xi1> to vector<8x32xi32>
    %56 = arith.sitofp %55 : vector<8x32xi32> to vector<8x32xf32>
    %57 = arith.addf %50, %56 : vector<8x32xf32>
    %c0_7 = arith.constant 0 : index
    %c0_8 = arith.constant 0 : index
    %58 = vector.load %arg2[%c0_7, %c0_8] : memref<8x32xf32, #tpu.memory_space<vmem>>, vector<8x32xf32>
    %59 = arith.mulf %58, %57 : vector<8x32xf32>
    %c0_9 = arith.constant 0 : index
    %c0_10 = arith.constant 0 : index
    %60 = vector.load %arg3[%c0_9, %c0_10] : memref<32x128xf32, #tpu.memory_space<vmem>>, vector<32x128xf32>
    %cst_11 = arith.constant dense<0.000000e+00> : vector<8x128xf32>
    %61 = tpu.matmul %59, %60, %cst_11 {dimension_numbers = #tpu.dot_dimension_numbers<[1], [0], [0], [1], [0, 0, 1, 1], [], []>} : vector<8x32xf32>, vector<32x128xf32>, vector<8x128xf32> -> vector<8x128xf32>
    %cst_12 = arith.constant 5.000000e-01 : f32
    %62 = vector.broadcast %cst_12 : f32 to vector<8x128xf32>
    %63 = arith.mulf %61, %62 : vector<8x128xf32>
    %c0_13 = arith.constant 0 : index
    %c0_14 = arith.constant 0 : index
    %64 = vector.load %arg4[%c0_13, %c0_14] : memref<1x128xf32, #tpu.memory_space<vmem>>, vector<1x128xf32>
    %65 = vector.broadcast %64 : vector<1x128xf32> to vector<8x128xf32>
    %66 = arith.addf %63, %65 : vector<8x128xf32>
    %c0_15 = arith.constant 0 : index
    %c0_16 = arith.constant 0 : index
    %67 = vector.load %arg5[%c0_15, %c0_16] : memref<8x128xf32, #tpu.memory_space<vmem>>, vector<8x128xf32>
    tpu.vector_store %arg5[%c0_15, %c0_16], %66 {strides = array<i32>} : memref<8x128xf32, #tpu.memory_space<vmem>>, vector<8x128xf32>,
    return
  }
  func.func @transform_0(%arg0: i32, %arg1: memref<1xi32, #tpu.memory_space<smem>>) -> (i32, i32) {
    %c0_i32 = arith.constant 0 : i32
    %c0_i32_0 = arith.constant 0 : i32
    return %arg0, %c0_i32 : i32, i32
  }
  func.func @transform_1(%arg0: i32, %arg1: memref<1xi32, #tpu.memory_space<smem>>) -> (i32, i32) {
    %c0_i32 = arith.constant 0 : i32
    %c0_i32_0 = arith.constant 0 : i32
    %c0_i32_1 = arith.constant 0 : i32
    return %c0_i32, %c0_i32_0 : i32, i32
  }
  func.func @transform_2(%arg0: i32, %arg1: memref<1xi32, #tpu.memory_space<smem>>) -> (i32, i32) {
    %c0_i32 = arith.constant 0 : i32
    %c0_i32_0 = arith.constant 0 : i32
    %c0_i32_1 = arith.constant 0 : i32
    return %c0_i32, %c0_i32_0 : i32, i32
  }
  func.func @transform_3(%arg0: i32, %arg1: memref<1xi32, #tpu.memory_space<smem>>) -> (i32, i32) {
    %c0_i32 = arith.constant 0 : i32
    %c0_i32_0 = arith.constant 0 : i32
    return %arg0, %c0_i32 : i32, i32
  }
}

</mosaic_0001>

<llo_original>
// kernel: tpu_custom_call.1
$region0: #{tpu_custom_call.1}
  #allocation0 [shape = 'u32[]', space=smem, size = 0x4, offset = 0x4, fixed_abs, tag = 'smem constant byte address 0x4 - core index']
  #allocation1 [shape = 'u32[144,128]{1,0:T(1,128)}', space=vmem, size = 0x12000, scoped, tag = 'internal scratch']
  #allocation2 [shape = 's32[1]{0}', space=sflag, size = 0x4, scoped, tag = 'scoped memory for tpu_custom_call.1']
  #allocation3 [shape = 's32[1]{0:T(128)S(6)}', space=smem, size = 0x200, scoped, tag = 'prefetched SMEM operand 0']
  %s0 = inlined_call_operand.<no memory space> [shape: s32[1], index: 0, kind: input, shape index: {}]
  %s1 = inlined_call_operand.hbm [shape: f32[8,32], index: 1, kind: input, shape index: {}]
  %s2 = inlined_call_operand.hbm [shape: f32[32,128], index: 2, kind: input, shape index: {}]
  %s3 = inlined_call_operand.vmem [shape: f32[1,128], index: 3, kind: input, shape index: {}]
  %s4 = inlined_call_operand.hbm [shape: f32[8,128], index: 4, kind: output, shape index: {}]
  %s5 = sld [smem:[#allocation0]]
  $region30: #{tpu_custom_call.1} parent=0
    _
  %s7 = ssub.s32 1, %s5
  %s8 = scalar_select 0, %s7, %s5
  %9 = sst [smem:[#allocation3]] %s0
  $region1: #{tpu_custom_call.1} parent=0
    #allocation4 [shape = 'u8[4096]{0}', space=vmem, size = 0x1000, scoped, tag = 'input window, operand 1, single buffered']
    #allocation5 [shape = 's32[1]{0}', space=sflag, size = 0x4, scoped, tag = 'scoped memory for tpu_custom_call.1']
    #allocation6 [shape = 's32[1]{0}', space=sflag, size = 0x4, scoped, tag = 'scoped memory for tpu_custom_call.1']
    #allocation7 [shape = 'u8[16384]{0}', space=vmem, size = 0x4000, scoped, tag = 'input window, operand 2, single buffered']
    #allocation8 [shape = 's32[1]{0}', space=sflag, size = 0x4, scoped, tag = 'scoped memory for tpu_custom_call.1']
    #allocation9 [shape = 'u8[4096]{0}', space=vmem, size = 0x1000, scoped, tag = 'output window, operand 0, single buffered']
    %10 = vsyncpa [#allocation5], 0
    %11 = vsyncpa [#allocation8], 0
    %12 = vsyncpa [#allocation6], 0
    // Predicated region
    $region2: #{tpu_custom_call.1} parent=1 // pred_check
      _
    $region3: #{tpu_custom_call.1} parent=1 // pred_check_branch
      %14 = sbr.rel (0) target = $region5
    $region4: #{tpu_custom_call.1} parent=1 // pred_region
      %s16 = ssub.s32 128, 128
      %17 = vsyncadd [#allocation5], %s16
      %s19 = sshll.u32 [#allocation4], 4
      %s20 = int_to_ptr.vmem [resolvable:$true] %s19
      %22 = dma.hbm_to_vmem [thread:$0]  %s1, 128, %s20, [#allocation5]
    $region5: #{tpu_custom_call.1} parent=1 // pred_fallthru
      _
    // Predicated region
    $region6: #{tpu_custom_call.1} parent=1 // pred_check
      _
    $region7: #{tpu_custom_call.1} parent=1 // pred_check_branch
      %24 = sbr.rel (0) target = $region9
    $region8: #{tpu_custom_call.1} parent=1 // pred_region
      %s26 = ssub.s32 512, 512
      %27 = vsyncadd [#allocation8], %s26
      %s28 = sshll.u32 [#allocation7], 4
      %s29 = int_to_ptr.vmem [resolvable:$true] %s28
      %34 = dma.hbm_to_vmem [thread:$0]  %s2, 512, %s29, [#allocation8], 128, 128, 8
    $region9: #{tpu_custom_call.1} parent=1 // pred_fallthru
      _
    // Predicated region
    $region10: #{tpu_custom_call.1} parent=1 // pred_check
      _
    $region11: #{tpu_custom_call.1} parent=1 // pred_check_branch
      %36 = sbr.rel (0) target = $region13
    $region12: #{tpu_custom_call.1} parent=1 // pred_region
      _
    $region13: #{tpu_custom_call.1} parent=1 // pred_fallthru
      _
    // Predicated region
    $region14: #{tpu_custom_call.1} parent=1 // pred_check
      _
    $region15: #{tpu_custom_call.1} parent=1 // pred_check_branch
      %38 = sbr.rel (0) target = $region17
    $region16: #{tpu_custom_call.1} parent=1 // pred_region
      %39 = dma.done [#allocation5], 128
    $region17: #{tpu_custom_call.1} parent=1 // pred_fallthru
      _
    // Predicated region
    $region18: #{tpu_custom_call.1} parent=1 // pred_check
      _
    $region19: #{tpu_custom_call.1} parent=1 // pred_check_branch
      %41 = sbr.rel (0) target = $region21
    $region20: #{tpu_custom_call.1} parent=1 // pred_region
      %42 = dma.done [#allocation8], 512
    $region21: #{tpu_custom_call.1} parent=1 // pred_fallthru
      _
    %s43 = sld [smem:[#allocation3]]
    %s44 = smul.u32 %s43, 2654435769
    %s45 = smul.u32 0, 256
    %s46 = sadd.s32 %s44, %s45
    %s47 = sadd.s32 %s46, 2135587861
    %v48 = vlaneseq
    %v49 = vshrl.u32 %v48, 7
    %v50 = vlaneseq
    %v51 = vand.u32 %v50, 127
    %v52 = vmul.u32 %v49, 32
    %v53 = vadd.s32 %v52, %v51
    %v54 = vstv %s47
    %v55 = vadd.s32 %v53, %v54
    %v56 = vshrl.u32 %v55, 16
    %v57 = vxor.u32 %v55, %v56
    %v58 = vmul.u32 %v57, 2146121005
    %v59 = vshrl.u32 %v58, 15
    %v60 = vxor.u32 %v58, %v59
    %v61 = vmul.u32 %v60, 2221713035
    %v62 = vshrl.u32 %v61, 16
    %v63 = vxor.u32 %v61, %v62
    %v64 = vand.u32 %v63, 255
    %vm65 = vcmp.ge.u32.totalorder %v64, 128
    %v66 = vsel %vm65, 1, 0
    %v67 = vcvt.s32.f32 %v66
    %v68 = vadd.f32 %v67, 0.0
    %v69 = vshrl.u32 %v63, 8
    %v70 = vand.u32 %v69, 255
    %vm71 = vcmp.ge.u32.totalorder %v70, 128
    %v72 = vsel %vm71, 1, 0
    %v73 = vcvt.s32.f32 %v72
    %v74 = vadd.f32 %v68, %v73
    %v75 = vshrl.u32 %v63, 16
    %v76 = vand.u32 %v75, 255
    %vm77 = vcmp.ge.u32.totalorder %v76, 128
    %v78 = vsel %vm77, 1, 0
    %v79 = vcvt.s32.f32 %v78
    %v80 = vadd.f32 %v74, %v79
    %v81 = vshrl.u32 %v63, 24
    %vm82 = vcmp.ge.u32.totalorder %v81, 128
    %v83 = vsel %vm82, 1, 0
    %v84 = vcvt.s32.f32 %v83
    %v85 = vadd.f32 %v80, %v84
    %v86 = vld [vmem:[#allocation4] sm:$0xff]
    %v87 = vmul.f32 %v86, %v85
    %v88 = vld [vmem:[#allocation7] sm:$0xff]
    %v89 = vld [vmem:[#allocation7 + $0x8] sm:$0xff]
    %v90 = vld [vmem:[#allocation7 + $0x10] sm:$0xff]
    %v91 = vld [vmem:[#allocation7 + $0x18] sm:$0xff]
    %vm92 = vcmask 261120
    %v94 = vsel %vm92, %v87, 0
    %96 = vmatprep.subr.mxu0 0.0
    %97 = vmatpush1.msra.mxu0 %v88
    %98 = vmatprep.subr.mxu0 0.0
    %99 = vmatpush1.msra.mxu0 %v89
    %100 = vmatprep.subr.mxu0 0.0
    %101 = vmatpush1.msra.mxu0 %v90
    %102 = vmatprep.subr.mxu0 0.0
    %103 = vmatpush1.msra.mxu0 %v91
    %104 = vmatprep.subr.mxu0 0.0
    %105 = vmatpush1.msra.mxu0 0.0
    %106 = vmatprep.subr.mxu0 0.0
    %107 = vmatpush1.msra.mxu0 0.0
    %108 = vmatprep.subr.mxu0 0.0
    %109 = vmatpush1.msra.mxu0 0.0
    %110 = vmatprep.subr.mxu0 0.0
    %111 = vmatpush1.msra.mxu0 0.0
    %112 = vmatprep.subr.mxu0 0.0
    %113 = vmatpush1.msra.mxu0 0.0
    %114 = vmatprep.subr.mxu0 0.0
    %115 = vmatpush1.msra.mxu0 0.0
    %116 = vmatprep.subr.mxu0 0.0
    %117 = vmatpush1.msra.mxu0 0.0
    %118 = vmatprep.subr.mxu0 0.0
    %119 = vmatpush1.msra.mxu0 0.0
    %120 = vmatprep.subr.mxu0 0.0
    %121 = vmatpush1.msra.mxu0 0.0
    %122 = vmatprep.subr.mxu0 0.0
    %123 = vmatpush1.msra.mxu0 0.0
    %124 = vmatprep.subr.mxu0 0.0
    %125 = vmatpush1.msra.mxu0 0.0
    %126 = vmatprep.subr.mxu0 0.0
    %127 = vmatpush1.msra.mxu0 0.0
    %128 = vmatprep.subr.mxu0 0.0
    %129 = vmatpush1.msra.mxu0 0.0
    %130 = vmatprep.subr.mxu0 0.0
    %131 = vmatpush1.msra.mxu0 0.0
    %132 = vmatprep.subr.mxu0 0.0
    %133 = vmatpush1.msra.mxu0 0.0
    %134 = vmatprep.subr.mxu0 0.0
    %135 = vmatpush1.msra.mxu0 0.0
    %136 = vmatprep.subr.mxu0 0.0
    %137 = vmatpush1.msra.mxu0 0.0
    %138 = vmatprep.subr.mxu0 0.0
    %139 = vmatpush1.msra.mxu0 0.0
    %140 = vmatprep.subr.mxu0 0.0
    %141 = vmatpush1.msra.mxu0 0.0
    %142 = vmatprep.subr.mxu0 0.0
    %143 = vmatpush1.msra.mxu0 0.0
    %144 = vmatprep.subr.mxu0 0.0
    %145 = vmatpush1.msra.mxu0 0.0
    %146 = vmatprep.subr.mxu0 0.0
    %147 = vmatpush1.msra.mxu0 0.0
    %148 = vmatprep.subr.mxu0 0.0
    %149 = vmatpush1.msra.mxu0 0.0
    %150 = vmatprep.subr.mxu0 0.0
    %151 = vmatpush1.msra.mxu0 0.0
    %152 = vmatprep.subr.mxu0 0.0
    %153 = vmatpush1.msra.mxu0 0.0
    %154 = vmatprep.subr.mxu0 0.0
    %155 = vmatpush1.msra.mxu0 0.0
    %156 = vmatprep.subr.mxu0 0.0
    %157 = vmatpush1.msra.mxu0 0.0
    %158 = vmatprep.subr.mxu0 0.0
    %159 = vmatpush1.msra.mxu0 0.0
    %160 = vmatprep.mubr.f32.mxu0 0.0
    %161 = vmatmul.mubr.f32.gmra.mrb[0].mxu0 %v94
    %v162 = vpop.f32.mrb[0].mxu0
    %v163 = vadd.f32 0.0, %v162
    %v164 = vpop.f32.mrb[0].mxu0
    %165 = vdwg.mxu0
    %v166 = vmul.f32 %v163, 0.5
    %v167 = vld [vmem:[%s3] sm:$0x1]
    %v169 = vlaneseq
    %v170 = vshrl.u32 %v169, 7
    %v171 = vsub.s32 0, %v170
    %v172 = vrot.slane %v167, %v171
    %v174 = vadd.f32 %v166, %v172
    %175 = vst [vmem:[#allocation9] sm:$0xff] %v174
    // Predicated region
    $region22: #{tpu_custom_call.1} parent=1 // pred_check
      _
    $region23: #{tpu_custom_call.1} parent=1 // pred_check_branch
      %177 = sbr.rel (0) target = $region25
    $region24: #{tpu_custom_call.1} parent=1 // pred_region
      %s179 = ssub.s32 128, 128
      %180 = vsyncadd [#allocation6], %s179
      %s182 = sshll.u32 [#allocation9], 4
      %s183 = int_to_ptr.vmem [resolvable:$true] %s182
      %185 = dma.vmem_to_hbm [thread:$0]  %s183, 128, %s4, [#allocation6]
    $region25: #{tpu_custom_call.1} parent=1 // pred_fallthru
      _
    // Predicated region
    $region26: #{tpu_custom_call.1} parent=1 // pred_check
      _
    $region27: #{tpu_custom_call.1} parent=1 // pred_check_branch
      %187 = sbr.rel (0) target = $region29
    $region28: #{tpu_custom_call.1} parent=1 // pred_region
      %188 = dma.done [#allocation6], 128
    $region29: #{tpu_custom_call.1} parent=1 // pred_fallthru
      _
    %189 = vsyncpa [#allocation5], 1
    %190 = vsyncpa [#allocation8], 1
    %191 = vsyncpa [#allocation6], 1

</llo_original>
